<compile_context>
chip_gen: v7x
topology: tpu7x:2x2x1
jax: 0.10.0
libtpu: 0.0.40
codegen_flags: <defaults>
</compile_context>

<pallas_src>
import jax
import jax.numpy as jnp
from jax.experimental import pallas as pl
from jax.experimental.pallas import tpu as pltpu


# ----------------------------------------------------------------------------- utils
def _round_up(x, m):
    return ((x + m - 1) // m) * m


def _cdiv(a, b):
    return (a + b - 1) // b


def _vmem_capacity():
    """Physical VMEM per TensorCore; falls back to 128 MiB if the query fails."""
    try:
        return int(pltpu.get_tpu_info().vmem_capacity_bytes)
    except Exception:
        return 128 * 2**20


def _plan(nf, out_feat, *, tk_max=512, force_resident=None):
    """Decide padded sizes and whether the weight stays fully resident in VMEM.

    Returns (nf_pad, out_pad, tk, resident).  Must be called with identical
    (nf, out_feat, tk_max, force_resident) by prepare_* and flatten_head_linear.
    """
    assert tk_max >= 128 and tk_max % 128 == 0
    out_pad = _round_up(out_feat, 128)
    nf_pad128 = _round_up(nf, 128)
    if force_resident is None:
        cap = _vmem_capacity()
        # ~24 MiB on 128-MiB-VMEM chips (v5e/v6e), ~12.8 MiB on v7x (64 MiB).
        resident = nf_pad128 * out_pad * 2 <= min(cap // 5, 24 * 2**20)
    else:
        resident = bool(force_resident)
    if resident:
        return nf_pad128, out_pad, nf_pad128, True
    nf_pad = _round_up(nf, tk_max)
    return nf_pad, out_pad, tk_max, False


def _block_spec(block_shape, index_map, *, buffered=None):
    """BlockSpec with an optional pipeline buffer-count hint (best-effort)."""
    if buffered is not None:
        try:
            return pl.BlockSpec(block_shape, index_map,
                                pipeline_mode=pl.Buffered(buffered))
        except Exception:  # older JAX without pipeline_mode -> plain spec
            pass
    return pl.BlockSpec(block_shape, index_map)


# ----------------------------------------------------------------------------- kernels
def _flatten_head_kernel_resident(x_ref, w_ref, b_ref, o_ref):
    # x_ref: (tm, nf_pad) f32, w_ref: (nf_pad, out_pad) bf16 (resident),
    # b_ref: (1, out_pad) f32, o_ref: (tm, out_pad) f32.
    x = x_ref[...].astype(w_ref.dtype)          # fused f32 -> bf16 cast on the VPU
    o_ref[...] = jnp.dot(x, w_ref[...],
                         preferred_element_type=jnp.float32) + b_ref[...]


def _flatten_head_kernel_ktiled(x_ref, w_ref, b_ref, o_ref):
    # x_ref: (tm, tk) f32, w_ref: (tk, out_pad) bf16 (streamed along K),
    # b_ref: (1, out_pad) f32, o_ref: (tm, out_pad) f32 (resident across K).
    k = pl.program_id(1)

    @pl.when(k == 0)
    def _():
        o_ref[...] = jnp.broadcast_to(b_ref[...], o_ref.shape)

    x = x_ref[...].astype(w_ref.dtype)          # fused f32 -> bf16 cast
    o_ref[...] += jnp.dot(x, w_ref[...], preferred_element_type=jnp.float32)


# ----------------------------------------------------------------------------- wrappers
def prepare_flatten_head_params(w, b, *, tk_max=512, force_resident=None,
                                param_dtype=jnp.bfloat16):
    """One-time parameter prep: transpose, pad, cast.

    w: (out_feat, nf)  PyTorch nn.Linear weight layout.   b: (out_feat,)
    Returns (w_t_pad (nf_pad, out_pad) bf16, bias_pad (1, out_pad) f32, out_feat).
    """
    out_feat, nf = w.shape
    nf_pad, out_pad, _, _ = _plan(nf, out_feat, tk_max=tk_max,
                                  force_resident=force_resident)
    w_t = jnp.transpose(w)                                       # once, not per forward
    w_t = jnp.pad(w_t, ((0, nf_pad - nf), (0, out_pad - out_feat)))
    bias = jnp.pad(b, (0, out_pad - out_feat)).reshape(1, out_pad)
    return w_t.astype(param_dtype), bias.astype(jnp.float32), out_feat


def flatten_head_linear(x2d, w_t_pad, bias_pad, out_feat, *, tm_max=256,
                        tk_max=512, force_resident=None):
    """y = x2d @ W^T + b with bf16 MXU operands and f32 accumulation.

    x2d: (M, nf) f32 (cast happens inside the kernel), w_t_pad: (nf_pad, out_pad)
    bf16, bias_pad: (1, out_pad) f32.  Returns (M, out_feat) f32.
    """
    M, nf = x2d.shape
    nf_pad, out_pad, tk, resident = _plan(nf, out_feat, tk_max=tk_max,
                                          force_resident=force_resident)
    assert w_t_pad.shape == (nf_pad, out_pad), (w_t_pad.shape, nf_pad, out_pad)
    assert bias_pad.shape == (1, out_pad), bias_pad.shape

    # --- M tiling: balanced tiles; >=2 steps when M is large enough (v7x 2 TCs).
    min_steps = 2 if M >= 16 else 1
    n_steps = max(min_steps, _cdiv(M, tm_max))
    tm = _round_up(_cdiv(M, n_steps), 8)

    # --- VMEM budget (generation-aware) and tm fitting.
    cap = _vmem_capacity()
    vmem_budget = min(cap * 3 // 4, 48 * 2**20)   # stay well under v7x's 64 MiB
    if resident:
        x_bufs = 2                                             # default double-buffer on x
        fixed = nf_pad * out_pad * 2 + out_pad * 4             # Buffered(1) weight + bias
    else:
        k_steps = nf_pad // tk
        x_bufs = 3 if k_steps >= 3 else 2                      # deeper buffering on K stream
        fixed = x_bufs * tk * out_pad * 2 + out_pad * 4
    per_row = x_bufs * tk * 4 + 2 * out_pad * 4                # f32 x tiles + f32 out tiles
    tm_fit = max(8, ((vmem_budget - fixed) // per_row) // 8 * 8)
    tm = max(8, min(tm, tm_fit))
    M_pad = _round_up(M, tm)
    m_steps = M_pad // tm

    # --- Pad activations (f32; the bf16 cast is fused into the kernel).
    x_p = x2d
    if (M_pad, nf_pad) != (M, nf):
        x_p = jnp.pad(x2d, ((0, M_pad - M), (0, nf_pad - nf)))

    # --- Grid / specs.
    if resident:
        grid = (m_steps,)
        in_specs = [
            pl.BlockSpec((tm, nf_pad), lambda i: (i, 0)),                    # activations
            _block_spec((nf_pad, out_pad), lambda i: (0, 0), buffered=1),    # weight, resident
            _block_spec((1, out_pad), lambda i: (0, 0), buffered=1),         # bias, resident
        ]
        out_specs = pl.BlockSpec((tm, out_pad), lambda i: (i, 0))
        dims = ("parallel",)
        kernel = _flatten_head_kernel_resident
    else:
        k_steps = nf_pad // tk
        grid = (m_steps, k_steps)                       # K last: o_ref accumulates across it
        in_specs = [
            _block_spec((tm, tk), lambda i, k: (i, k), buffered=x_bufs),     # activations
            _block_spec((tk, out_pad), lambda i, k: (k, 0), buffered=x_bufs),# weight stream
            _block_spec((1, out_pad), lambda i, k: (0, 0), buffered=1),      # bias
        ]
        out_specs = pl.BlockSpec((tm, out_pad), lambda i, k: (i, 0))
        dims = ("parallel", "arbitrary")
        kernel = _flatten_head_kernel_ktiled

    # --- Cost / VMEM hints.
    w_bytes = nf_pad * out_pad * 2
    w_traffic = w_bytes if resident else m_steps * w_bytes     # re-streamed per M tile
    bytes_accessed = int(M_pad * nf_pad * 4 + w_traffic + out_pad * 4
                         + M_pad * out_pad * 4)
    flops = 2 * M_pad * nf_pad * out_pad
    vmem_est = fixed + x_bufs * tm * tk * 4 + 2 * tm * out_pad * 4
    vmem_limit = int(min(cap * 3 // 4, max(32 * 2**20, 2 * vmem_est)))

    y_pad = pl.pallas_call(
        kernel,
        out_shape=jax.ShapeDtypeStruct((M_pad, out_pad), jnp.float32),
        grid_spec=pltpu.PrefetchScalarGridSpec(
            num_scalar_prefetch=0,
            grid=grid,
            in_specs=in_specs,
            out_specs=out_specs,
        ),
        compiler_params=pltpu.CompilerParams(
            dimension_semantics=dims,
            vmem_limit_bytes=vmem_limit,
        ),
        cost_estimate=pl.CostEstimate(
            flops=flops, transcendentals=0, bytes_accessed=bytes_accessed),
    )(x_p, w_t_pad, bias_pad)

    # Padding must be sliced off BEFORE the downstream reshape reinterpretation.
    # (For very large M, writing out_feat directly would skip this pass.)
    return y_pad[:M, :out_feat]


def flatten_head_forward(x, w_t_pad, bias_pad, out_feat, target_window, *,
                         tm_max=256, tk_max=512, force_resident=None):
    """Reproduces FlattenHead.forward (eval mode: Dropout(0) == identity).

    x: (B, n_vars, d_model, patch_num)  ->  (B, target_window, n_vars * 34)
    """
    B, n_vars, d_model, patch_num = x.shape
    nf = d_model * patch_num
    # nn.Flatten(start_dim=-2): (B, n_vars, nf); hot path is the Linear over B*n_vars rows.
    x2d = x.reshape(B * n_vars, nf)
    y2d = flatten_head_linear(x2d, w_t_pad, bias_pad, out_feat,
                              tm_max=tm_max, tk_max=tk_max,
                              force_resident=force_resident)
    y = y2d.reshape(B, n_vars, out_feat)
    # torch reshape(B, target_window, -1): row-major reinterpretation of the SAME
    # (n_vars, tw*34) buffer as (tw, n_vars*34) — valid because out padding is gone.
    return y.reshape(B, target_window, -1)


# ----------------------------------------------------------------------------- demo / check
if __name__ == "__main__":
    key = jax.random.PRNGKey(0)

    def run_case(B, n_vars, d_model, patch_num, target_window, *, tk_max=512,
                 force_resident=None, tol=3e-2):
        nf = d_model * patch_num
        out_feat = target_window * 34
        kx, kw, kb = jax.random.split(jax.random.fold_in(key, nf), 3)
        x = jax.random.normal(kx, (B, n_vars, d_model, patch_num), dtype=jnp.float32)
        bound = 1.0 / float(nf) ** 0.5      # PyTorch Linear default init range
        w = jax.random.uniform(kw, (out_feat, nf), minval=-bound, maxval=bound,
                               dtype=jnp.float32)
        b = jax.random.uniform(kb, (out_feat,), minval=-bound, maxval=bound,
                               dtype=jnp.float32)

        w_t_pad, bias_pad, out_feat_p = prepare_flatten_head_params(
            w, b, tk_max=tk_max, force_resident=force_resident)
        out = flatten_head_forward(x, w_t_pad, bias_pad, out_feat_p, target_window,
                                   tk_max=tk_max, force_resident=force_resident)
        out = jax.block_until_ready(out)

        # Pure-JAX f32 reference of the torch forward.
        ref = (x.reshape(B, n_vars, nf) @ w.T + b).reshape(B, target_window, -1)
        assert out.shape == (B, target_window, n_vars * 34), out.shape
        max_err = float(jnp.max(jnp.abs(out - ref)))
        assert jnp.allclose(out, ref, atol=tol, rtol=tol), max_err
        return max_err

    # Small shapes implied by the module: weight-resident fast path (1-D grid).
    run_case(B=2, n_vars=4, d_model=8, patch_num=4, target_window=8)
    # Exercise the K-tiled fallback at small size (forced, tk=128 -> 2 K steps).
    run_case(B=2, n_vars=4, d_model=16, patch_num=16, target_window=8,
             tk_max=128, force_resident=False, tol=5e-2)

    # TODO(synk): nn.Dropout(head_dropout) is identity here (p=0 / eval mode); a
    # training-mode dropout mask is not implemented as a kernel.
    print("KERNEL_OK")
</pallas_src>

<mosaic_0001>
module attributes {stable_mosaic.version = 11 : i64} {
  func.func @_flatten_head_kernel_resident(%arg0: i32, %arg1: memref<8x128xf32, #tpu.memory_space<vmem>>, %arg2: memref<128x384xbf16, #tpu.memory_space<vmem>>, %arg3: memref<1x384xf32, #tpu.memory_space<vmem>>, %arg4: memref<8x384xf32, #tpu.memory_space<vmem>>) attributes {dimension_semantics = [#tpu.dimension_semantics<parallel>], iteration_bounds = array<i64: 1>, scalar_prefetch = 0 : i64, scratch_operands = 0 : i64, tpu.core_type = #tpu.core_type<tc>, window_params = [{transform_indices = @transform_0, window_bounds = array<i64: 8, 128>}, {pipeline_mode = #tpu.pipeline_mode<synchronous>, transform_indices = @transform_1, window_bounds = array<i64: 128, 384>}, {pipeline_mode = #tpu.pipeline_mode<synchronous>, transform_indices = @transform_2, window_bounds = array<i64: 1, 384>}, {transform_indices = @transform_3, window_bounds = array<i64: 8, 384>}]} {
    %c0 = arith.constant 0 : index
    %c0_0 = arith.constant 0 : index
    %0 = vector.load %arg1[%c0, %c0_0] : memref<8x128xf32, #tpu.memory_space<vmem>>, vector<8x128xf32>
    %1 = arith.truncf %0 : vector<8x128xf32> to vector<8x128xbf16>
    %c0_1 = arith.constant 0 : index
    %c0_2 = arith.constant 0 : index
    %2 = vector.load %arg2[%c0_1, %c0_2] : memref<128x384xbf16, #tpu.memory_space<vmem>>, vector<128x384xbf16>
    %cst = arith.constant dense<0.000000e+00> : vector<8x384xf32>
    %3 = tpu.matmul %1, %2, %cst {dimension_numbers = #tpu.dot_dimension_numbers<[1], [0], [0], [1], [0, 0, 1, 1], [], []>} : vector<8x128xbf16>, vector<128x384xbf16>, vector<8x384xf32> -> vector<8x384xf32>
    %c0_3 = arith.constant 0 : index
    %c0_4 = arith.constant 0 : index
    %4 = vector.load %arg3[%c0_3, %c0_4] : memref<1x384xf32, #tpu.memory_space<vmem>>, vector<1x384xf32>
    %5 = vector.broadcast %4 : vector<1x384xf32> to vector<8x384xf32>
    %6 = arith.addf %3, %5 : vector<8x384xf32>
    %c0_5 = arith.constant 0 : index
    %c0_6 = arith.constant 0 : index
    %7 = vector.load %arg4[%c0_5, %c0_6] : memref<8x384xf32, #tpu.memory_space<vmem>>, vector<8x384xf32>
    tpu.vector_store %arg4[%c0_5, %c0_6], %6 {strides = array<i32>} : memref<8x384xf32, #tpu.memory_space<vmem>>, vector<8x384xf32>,
    return
  }
  func.func @transform_0(%arg0: i32) -> (i32, i32) {
    %c0_i32 = arith.constant 0 : i32
    %c0_i32_0 = arith.constant 0 : i32
    return %arg0, %c0_i32 : i32, i32
  }
  func.func @transform_1(%arg0: i32) -> (i32, i32) {
    %c0_i32 = arith.constant 0 : i32
    %c0_i32_0 = arith.constant 0 : i32
    %c0_i32_1 = arith.constant 0 : i32
    return %c0_i32, %c0_i32_0 : i32, i32
  }
  func.func @transform_2(%arg0: i32) -> (i32, i32) {
    %c0_i32 = arith.constant 0 : i32
    %c0_i32_0 = arith.constant 0 : i32
    %c0_i32_1 = arith.constant 0 : i32
    return %c0_i32, %c0_i32_0 : i32, i32
  }
  func.func @transform_3(%arg0: i32) -> (i32, i32) {
    %c0_i32 = arith.constant 0 : i32
    %c0_i32_0 = arith.constant 0 : i32
    return %arg0, %c0_i32 : i32, i32
  }
}

</mosaic_0001>

<llo_original>
// kernel: tpu_custom_call.1
$region0: #{tpu_custom_call.1}
  #allocation0 [shape = 'u32[]', space=smem, size = 0x4, offset = 0x4, fixed_abs, tag = 'smem constant byte address 0x4 - core index']
  #allocation1 [shape = 'u32[144,128]{1,0:T(1,128)}', space=vmem, size = 0x12000, scoped, tag = 'internal scratch']
  %s0 = inlined_call_operand.hbm [shape: f32[8,128], index: 0, kind: input, shape index: {}]
  %s1 = inlined_call_operand.hbm [shape: bf16[128,384], index: 1, kind: input, shape index: {}]
  %s2 = inlined_call_operand.vmem [shape: f32[1,384], index: 2, kind: input, shape index: {}]
  %s3 = inlined_call_operand.hbm [shape: f32[8,384], index: 3, kind: output, shape index: {}]
  %s4 = sld [smem:[#allocation0]]
  $region30: #{tpu_custom_call.1} parent=0
    _
  %s6 = ssub.s32 1, %s4
  %s7 = scalar_select 0, %s6, %s4
  $region1: #{tpu_custom_call.1} parent=0
    #allocation2 [shape = 'u8[4096]{0}', space=vmem, size = 0x1000, scoped, tag = 'input window, operand 0, single buffered']
    #allocation3 [shape = 's32[1]{0}', space=sflag, size = 0x4, scoped, tag = 'scoped memory for tpu_custom_call.1']
    #allocation4 [shape = 's32[1]{0}', space=sflag, size = 0x4, scoped, tag = 'scoped memory for tpu_custom_call.1']
    #allocation5 [shape = 'u8[98304]{0}', space=vmem, size = 0x18000, scoped, tag = 'input window, operand 1, single buffered']
    #allocation6 [shape = 's32[1]{0}', space=sflag, size = 0x4, scoped, tag = 'scoped memory for tpu_custom_call.1']
    #allocation7 [shape = 'u8[12288]{0}', space=vmem, size = 0x3000, scoped, tag = 'output window, operand 0, single buffered']
    %8 = vsyncpa [#allocation3], 0
    %9 = vsyncpa [#allocation6], 0
    %10 = vsyncpa [#allocation4], 0
    // Predicated region
    $region2: #{tpu_custom_call.1} parent=1 // pred_check
      _
    $region3: #{tpu_custom_call.1} parent=1 // pred_check_branch
      %12 = sbr.rel (0) target = $region5
    $region4: #{tpu_custom_call.1} parent=1 // pred_region
      %s14 = ssub.s32 128, 128
      %15 = vsyncadd [#allocation3], %s14
      %s17 = sshll.u32 [#allocation2], 4
      %s18 = int_to_ptr.vmem [resolvable:$true] %s17
      %20 = dma.hbm_to_vmem [thread:$0]  %s0, 128, %s18, [#allocation3]
    $region5: #{tpu_custom_call.1} parent=1 // pred_fallthru
      _
    // Predicated region
    $region6: #{tpu_custom_call.1} parent=1 // pred_check
      _
    $region7: #{tpu_custom_call.1} parent=1 // pred_check_branch
      %22 = sbr.rel (0) target = $region9
    $region8: #{tpu_custom_call.1} parent=1 // pred_region
      %s24 = ssub.s32 3072, 3072
      %25 = vsyncadd [#allocation6], %s24
      %s26 = sshll.u32 [#allocation5], 4
      %s27 = int_to_ptr.vmem [resolvable:$true] %s26
      %32 = dma.hbm_to_vmem [thread:$0]  %s1, 3072, %s27, [#allocation6], 192, 192, 12
    $region9: #{tpu_custom_call.1} parent=1 // pred_fallthru
      _
    // Predicated region
    $region10: #{tpu_custom_call.1} parent=1 // pred_check
      _
    $region11: #{tpu_custom_call.1} parent=1 // pred_check_branch
      %34 = sbr.rel (0) target = $region13
    $region12: #{tpu_custom_call.1} parent=1 // pred_region
      _
    $region13: #{tpu_custom_call.1} parent=1 // pred_fallthru
      _
    // Predicated region
    $region14: #{tpu_custom_call.1} parent=1 // pred_check
      _
    $region15: #{tpu_custom_call.1} parent=1 // pred_check_branch
      %36 = sbr.rel (0) target = $region17
    $region16: #{tpu_custom_call.1} parent=1 // pred_region
      %37 = dma.done [#allocation3], 128
    $region17: #{tpu_custom_call.1} parent=1 // pred_fallthru
      _
    // Predicated region
    $region18: #{tpu_custom_call.1} parent=1 // pred_check
      _
    $region19: #{tpu_custom_call.1} parent=1 // pred_check_branch
      %39 = sbr.rel (0) target = $region21
    $region20: #{tpu_custom_call.1} parent=1 // pred_region
      %40 = dma.done [#allocation6], 3072
    $region21: #{tpu_custom_call.1} parent=1 // pred_fallthru
      _
    %v42 = vld [vmem:[#allocation2] sm:$0xff]
    %v43 = vpack.c.bf16 %v42, %v42
    %v44 = vld [vmem:[#allocation5] sm:$0xff]
    %v45 = vld [vmem:[#allocation5 + $0x8] sm:$0xf]
    %v46 = vld [vmem:[#allocation5 + $0xc] sm:$0xff]
    %v47 = vld [vmem:[#allocation5 + $0x14] sm:$0xf]
    %v48 = vld [vmem:[#allocation5 + $0x18] sm:$0xff]
    %v49 = vld [vmem:[#allocation5 + $0x20] sm:$0xf]
    %v50 = vld [vmem:[#allocation5 + $0x24] sm:$0xff]
    %v51 = vld [vmem:[#allocation5 + $0x2c] sm:$0xf]
    %v52 = vld [vmem:[#allocation5 + $0x30] sm:$0xff]
    %v53 = vld [vmem:[#allocation5 + $0x38] sm:$0xf]
    %v54 = vld [vmem:[#allocation5 + $0x3c] sm:$0xff]
    %v55 = vld [vmem:[#allocation5 + $0x44] sm:$0xf]
    %v56 = vld [vmem:[#allocation5 + $0x48] sm:$0xff]
    %v57 = vld [vmem:[#allocation5 + $0x50] sm:$0xf]
    %v58 = vld [vmem:[#allocation5 + $0x54] sm:$0xff]
    %v59 = vld [vmem:[#allocation5 + $0x5c] sm:$0xf]
    %v60 = vld [vmem:[#allocation5 + $0x60] sm:$0xff]
    %v61 = vld [vmem:[#allocation5 + $0x68] sm:$0xf]
    %v62 = vld [vmem:[#allocation5 + $0x6c] sm:$0xff]
    %v63 = vld [vmem:[#allocation5 + $0x74] sm:$0xf]
    %v64 = vld [vmem:[#allocation5 + $0x78] sm:$0xff]
    %v65 = vld [vmem:[#allocation5 + $0x80] sm:$0xf]
    %v66 = vld [vmem:[#allocation5 + $0x84] sm:$0xff]
    %v67 = vld [vmem:[#allocation5 + $0x8c] sm:$0xf]
    %v68 = vld [vmem:[#allocation5 + $0x90] sm:$0xff]
    %v69 = vld [vmem:[#allocation5 + $0x98] sm:$0xf]
    %v70 = vld [vmem:[#allocation5 + $0x9c] sm:$0xff]
    %v71 = vld [vmem:[#allocation5 + $0xa4] sm:$0xf]
    %v72 = vld [vmem:[#allocation5 + $0xa8] sm:$0xff]
    %v73 = vld [vmem:[#allocation5 + $0xb0] sm:$0xf]
    %v74 = vld [vmem:[#allocation5 + $0xb4] sm:$0xff]
    %v75 = vld [vmem:[#allocation5 + $0xbc] sm:$0xf]
    %v76 = vld [vmem:[%s2] sm:$0x7]
    %v78 = vlaneseq
    %v79 = vshrl.u32 %v78, 7
    %v80 = vsub.s32 0, %v79
    %v81 = vrot.slane %v76, %v80
    %v82 = vlaneseq
    %v83 = vshrl.u32 %v82, 7
    %v84 = vsub.s32 1, %v83
    %v85 = vrot.slane %v76, %v84
    %v86 = vlaneseq
    %v87 = vshrl.u32 %v86, 7
    %v88 = vsub.s32 2, %v87
    %v89 = vrot.slane %v76, %v88
    %v125 = vunpack.c.l.b16 %v44
    %v126 = vunpack.c.h.b16 %v44
    %v127 = vunpack.c.l.b16 %v45
    %v128 = vunpack.c.l.b16 %v46
    %v129 = vunpack.c.h.b16 %v46
    %v130 = vunpack.c.l.b16 %v47
    %v131 = vunpack.c.l.b16 %v48
    %v132 = vunpack.c.h.b16 %v48
    %v133 = vunpack.c.l.b16 %v49
    %v134 = vunpack.c.l.b16 %v50
    %v135 = vunpack.c.h.b16 %v50
    %v136 = vunpack.c.l.b16 %v51
    %v137 = vunpack.c.l.b16 %v52
    %v138 = vunpack.c.h.b16 %v52
    %v139 = vunpack.c.l.b16 %v53
    %v140 = vunpack.c.l.b16 %v54
    %v141 = vunpack.c.h.b16 %v54
    %v142 = vunpack.c.l.b16 %v55
    %v143 = vunpack.c.l.b16 %v56
    %v144 = vunpack.c.h.b16 %v56
    %v145 = vunpack.c.l.b16 %v57
    %v146 = vunpack.c.l.b16 %v58
    %v147 = vunpack.c.h.b16 %v58
    %v148 = vunpack.c.l.b16 %v59
    %v149 = vunpack.c.l.b16 %v60
    %v150 = vunpack.c.h.b16 %v60
    %v151 = vunpack.c.l.b16 %v61
    %v152 = vunpack.c.l.b16 %v62
    %v153 = vunpack.c.h.b16 %v62
    %v154 = vunpack.c.l.b16 %v63
    %v155 = vunpack.c.l.b16 %v64
    %v156 = vunpack.c.h.b16 %v64
    %v157 = vunpack.c.l.b16 %v65
    %v158 = vunpack.c.l.b16 %v66
    %v159 = vunpack.c.h.b16 %v66
    %v160 = vunpack.c.l.b16 %v67
    %v161 = vunpack.c.l.b16 %v68
    %v162 = vunpack.c.h.b16 %v68
    %v163 = vunpack.c.l.b16 %v69
    %v164 = vunpack.c.l.b16 %v70
    %v165 = vunpack.c.h.b16 %v70
    %v166 = vunpack.c.l.b16 %v71
    %v167 = vunpack.c.l.b16 %v72
    %v168 = vunpack.c.h.b16 %v72
    %v169 = vunpack.c.l.b16 %v73
    %v170 = vunpack.c.l.b16 %v74
    %v171 = vunpack.c.h.b16 %v74
    %v172 = vunpack.c.l.b16 %v75
    %v173 = vpack.c.b16 %v128, %v125
    %v174 = vpack.c.b16 %v129, %v126
    %v175 = vpack.c.b16 %v130, %v127
    %v176 = vpack.c.b16 %v134, %v131
    %v177 = vpack.c.b16 %v135, %v132
    %v178 = vpack.c.b16 %v136, %v133
    %v179 = vpack.c.b16 %v140, %v137
    %v180 = vpack.c.b16 %v141, %v138
    %v181 = vpack.c.b16 %v142, %v139
    %v182 = vpack.c.b16 %v146, %v143
    %v183 = vpack.c.b16 %v147, %v144
    %v184 = vpack.c.b16 %v148, %v145
    %v185 = vpack.c.b16 %v152, %v149
    %v186 = vpack.c.b16 %v153, %v150
    %v187 = vpack.c.b16 %v154, %v151
    %v188 = vpack.c.b16 %v158, %v155
    %v189 = vpack.c.b16 %v159, %v156
    %v190 = vpack.c.b16 %v160, %v157
    %v191 = vpack.c.b16 %v164, %v161
    %v192 = vpack.c.b16 %v165, %v162
    %v193 = vpack.c.b16 %v166, %v163
    %v194 = vpack.c.b16 %v170, %v167
    %v195 = vpack.c.b16 %v171, %v168
    %v196 = vpack.c.b16 %v172, %v169
    %221 = vmatprep.subr.bf16.mxu0 %v174
    %222 = vmatpush1.bf16.msra.mxu0 %v173
    %223 = vmatprep.subr.bf16.mxu0 %v177
    %224 = vmatpush1.bf16.msra.mxu0 %v176
    %225 = vmatprep.subr.bf16.mxu0 %v180
    %226 = vmatpush1.bf16.msra.mxu0 %v179
    %227 = vmatprep.subr.bf16.mxu0 %v183
    %228 = vmatpush1.bf16.msra.mxu0 %v182
    %229 = vmatprep.subr.bf16.mxu0 %v186
    %230 = vmatpush1.bf16.msra.mxu0 %v185
    %231 = vmatprep.subr.bf16.mxu0 %v189
    %232 = vmatpush1.bf16.msra.mxu0 %v188
    %233 = vmatprep.subr.bf16.mxu0 %v192
    %234 = vmatpush1.bf16.msra.mxu0 %v191
    %235 = vmatprep.subr.bf16.mxu0 %v195
    %236 = vmatpush1.bf16.msra.mxu0 %v194
    %237 = vmatprep.subr.bf16.mxu0 0
    %238 = vmatpush1.bf16.msra.mxu0 0
    %239 = vmatprep.subr.bf16.mxu0 0
    %240 = vmatpush1.bf16.msra.mxu0 0
    %241 = vmatprep.subr.bf16.mxu0 0
    %242 = vmatpush1.bf16.msra.mxu0 0
    %243 = vmatprep.subr.bf16.mxu0 0
    %244 = vmatpush1.bf16.msra.mxu0 0
    %245 = vmatprep.subr.bf16.mxu0 0
    %246 = vmatpush1.bf16.msra.mxu0 0
    %247 = vmatprep.subr.bf16.mxu0 0
    %248 = vmatpush1.bf16.msra.mxu0 0
    %249 = vmatprep.subr.bf16.mxu0 0
    %250 = vmatpush1.bf16.msra.mxu0 0
    %251 = vmatprep.subr.bf16.mxu0 0
    %252 = vmatpush1.bf16.msra.mxu0 0
    %253 = vmatprep.mubr.bf16.mxu0 0
    %254 = vmatmul.mubr.bf16.gmra.mrb[0].mxu0 %v43
    %v255 = vpop.f32.mrb[0].mxu0
    %v256 = vadd.f32 %v81, %v255
    %v257 = vpop.f32.mrb[0].mxu0
    %v258 = vadd.f32 %v85, %v257
    %v259 = vpop.f32.mrb[0].mxu0
    %v260 = vpop.f32.mrb[0].mxu0
    %261 = vdwg.mxu0
    %262 = vmatprep.subr.bf16.mxu0 0
    %263 = vmatpush1.bf16.msra.mxu0 %v175
    %264 = vmatprep.subr.bf16.mxu0 0
    %265 = vmatpush1.bf16.msra.mxu0 %v178
    %266 = vmatprep.subr.bf16.mxu0 0
    %267 = vmatpush1.bf16.msra.mxu0 %v181
    %268 = vmatprep.subr.bf16.mxu0 0
    %269 = vmatpush1.bf16.msra.mxu0 %v184
    %270 = vmatprep.subr.bf16.mxu0 0
    %271 = vmatpush1.bf16.msra.mxu0 %v187
    %272 = vmatprep.subr.bf16.mxu0 0
    %273 = vmatpush1.bf16.msra.mxu0 %v190
    %274 = vmatprep.subr.bf16.mxu0 0
    %275 = vmatpush1.bf16.msra.mxu0 %v193
    %276 = vmatprep.subr.bf16.mxu0 0
    %277 = vmatpush1.bf16.msra.mxu0 %v196
    %278 = vmatprep.subr.bf16.mxu0 0
    %279 = vmatpush1.bf16.msra.mxu0 0
    %280 = vmatprep.subr.bf16.mxu0 0
    %281 = vmatpush1.bf16.msra.mxu0 0
    %282 = vmatprep.subr.bf16.mxu0 0
    %283 = vmatpush1.bf16.msra.mxu0 0
    %284 = vmatprep.subr.bf16.mxu0 0
    %285 = vmatpush1.bf16.msra.mxu0 0
    %286 = vmatprep.subr.bf16.mxu0 0
    %287 = vmatpush1.bf16.msra.mxu0 0
    %288 = vmatprep.subr.bf16.mxu0 0
    %289 = vmatpush1.bf16.msra.mxu0 0
    %290 = vmatprep.subr.bf16.mxu0 0
    %291 = vmatpush1.bf16.msra.mxu0 0
    %292 = vmatprep.subr.bf16.mxu0 0
    %293 = vmatpush1.bf16.msra.mxu0 0
    %294 = vmatprep.mubr.bf16.mxu0 0
    %295 = vmatmul.mubr.bf16.gmra.mrb[0].mxu0 %v43
    %v296 = vpop.f32.mrb[0].mxu0
    %v297 = vadd.f32 %v89, %v296
    %v298 = vpop.f32.mrb[0].mxu0
    %v299 = vpop.f32.mrb[0].mxu0
    %v300 = vpop.f32.mrb[0].mxu0
    %301 = vdwg.mxu0
    %302 = vst [vmem:[#allocation7] sm:$0xff] %v256
    %303 = vst [vmem:[#allocation7 + $0x8] sm:$0xff] %v258
    %304 = vst [vmem:[#allocation7 + $0x10] sm:$0xff] %v297
    // Predicated region
    $region22: #{tpu_custom_call.1} parent=1 // pred_check
      _
    $region23: #{tpu_custom_call.1} parent=1 // pred_check_branch
      %306 = sbr.rel (0) target = $region25
    $region24: #{tpu_custom_call.1} parent=1 // pred_region
      %s308 = ssub.s32 384, 384
      %309 = vsyncadd [#allocation4], %s308
      %s311 = sshll.u32 [#allocation7], 4
      %s312 = int_to_ptr.vmem [resolvable:$true] %s311
      %314 = dma.vmem_to_hbm [thread:$0]  %s312, 384, %s3, [#allocation4]
    $region25: #{tpu_custom_call.1} parent=1 // pred_fallthru
      _
    // Predicated region
    $region26: #{tpu_custom_call.1} parent=1 // pred_check
      _
    $region27: #{tpu_custom_call.1} parent=1 // pred_check_branch
      %316 = sbr.rel (0) target = $region29
    $region28: #{tpu_custom_call.1} parent=1 // pred_region
      %317 = dma.done [#allocation4], 384
    $region29: #{tpu_custom_call.1} parent=1 // pred_fallthru
      _
    %318 = vsyncpa [#allocation3], 1
    %319 = vsyncpa [#allocation6], 1
    %320 = vsyncpa [#allocation4], 1

</llo_original>
